<compile_context>
chip_gen: v5e
topology: v5e:2x2
jax: 0.10.0
libtpu: 0.0.40
codegen_flags: <defaults>
</compile_context>

<pallas_src>
import functools

import jax
import jax.numpy as jnp
from jax import lax
from jax.experimental import pallas as pl
from jax.experimental.pallas import tpu as pltpu


def _attention_kernel(x_ref, w_ref, o_ref, *, scale, head_size, seq_len, batch):
    """Single grid step.

    x_ref : (B*L, D)  f32 VMEM   (cast to bf16 in-kernel for the MXU)
    w_ref : (D, 3H)   bf16 VMEM  (pre-fused [Wq | Wk | Wv])
    o_ref : (B, L, H) f32 VMEM
    """
    H = head_size
    L = seq_len

    # One fused QKV projection over all B*L rows, bf16 operands, f32 accumulate.
    x = x_ref[...].astype(jnp.bfloat16)                  # (B*L, D)  VPU cast
    w = w_ref[...]                                       # (D, 3H)   bf16
    qkv = jnp.dot(x, w, preferred_element_type=jnp.float32)   # (B*L, 3H) f32

    # Causal mask (shared across batch elements): tril(ones(L, L)).
    row = lax.broadcasted_iota(jnp.int32, (L, L), 0)
    col = lax.broadcasted_iota(jnp.int32, (L, L), 1)
    causal = row >= col

    # Static unroll over the (tiny) batch for scores / softmax / PV.
    # If B ever grows beyond a handful, convert to lax.fori_loop(unroll=True)
    # to bound vreg live ranges.
    for b in range(batch):
        qkv_b = qkv[b * L:(b + 1) * L, :]                # (L, 3H) f32 (static slice)
        q = qkv_b[:, 0:H]
        k = qkv_b[:, H:2 * H]
        v = qkv_b[:, 2 * H:3 * H]

        # Scaled attention scores: contract the head dim directly (no explicit
        # transpose of k); bf16 operands, f32 accumulation.
        s = lax.dot_general(
            q.astype(jnp.bfloat16), k.astype(jnp.bfloat16),
            (((1,), (1,)), ((), ())),
            preferred_element_type=jnp.float32)          # (L, L) f32
        s = s * scale

        # Causal mask -> large finite negative (NaN-safe), f32 softmax.
        s = jnp.where(causal, s, -1e30)
        m = jnp.max(s, axis=-1, keepdims=True)
        e = jnp.exp(s - m)
        denom = jnp.sum(e, axis=-1, keepdims=True)
        p = e / denom                                    # exact divide (cost ~0 at L=17)

        # Attention-weighted values; bf16 operands, f32 accumulation.
        o = jnp.dot(p.astype(jnp.bfloat16), v.astype(jnp.bfloat16),
                    preferred_element_type=jnp.float32)  # (L, H)
        o_ref[b] = o.astype(o_ref.dtype)


def prepare_qkv_weight(wq, wk, wv):
    """One-time parameter prep (OUTSIDE the hot path): fuse to (D, 3H) bf16."""
    return jnp.concatenate([wq, wk, wv], axis=1).astype(jnp.bfloat16)


def attention_forward(x, w_qkv):
    """x: (B, L, dmodel) float32; w_qkv: pre-fused (dmodel, 3*head_size) bf16."""
    B, L, D = x.shape
    H = w_qkv.shape[1] // 3
    scale = float(H) ** (-0.5)

    # Contiguous reshape (metadata only) so the kernel does ONE (B*L, D)x(D, 3H) dot.
    x2 = x.reshape(B * L, D)

    kernel = functools.partial(
        _attention_kernel, scale=scale, head_size=H, seq_len=L, batch=B)

    return pl.pallas_call(
        kernel,
        out_shape=jax.ShapeDtypeStruct((B, L, H), x.dtype),
        grid_spec=pltpu.PrefetchScalarGridSpec(
            num_scalar_prefetch=0,
            grid=(1,),                                   # single step on all gens
            in_specs=[
                pl.BlockSpec((B * L, D), lambda i: (0, 0)),
                pl.BlockSpec((D, 3 * H), lambda i: (0, 0)),
            ],
            out_specs=pl.BlockSpec((B, L, H), lambda i: (0, 0, 0)),
        ),
        compiler_params=pltpu.CompilerParams(
            dimension_semantics=("arbitrary",),
        ),
    )(x2, w_qkv)


def attention_reference(x, wq, wk, wv):
    """Pure-JAX f32 reference mirroring the PyTorch forward."""
    H = wq.shape[1]
    scale = float(H) ** (-0.5)
    q = x @ wq
    k = x @ wk
    v = x @ wv
    wei = jnp.einsum("bld,bmd->blm", q, k) * scale
    L = x.shape[1]
    tril = jnp.tril(jnp.ones((L, L), dtype=x.dtype))
    wei = jnp.where(tril == 0, -jnp.inf, wei)
    wei = jax.nn.softmax(wei, axis=-1)
    return wei @ v


if __name__ == "__main__":
    # Shapes consistent with the module: L = qH*qW + 1 with qH = qW = 4 -> L = 17,
    # dmodel = 128 (fixed in the module), head_size = 32, batch = 2.
    B, L, DMODEL, HEAD = 2, 4 * 4 + 1, 128, 32

    key = jax.random.PRNGKey(0)
    kx, kq, kk, kv = jax.random.split(key, 4)

    x = jax.random.normal(kx, (B, L, DMODEL), dtype=jnp.float32)
    # nn.Linear(dmodel, head_size, bias=False) weight is (head_size, dmodel);
    # store the transposed (dmodel, head_size) form for the kernel.
    wq = jax.random.normal(kq, (DMODEL, HEAD), dtype=jnp.float32) * (DMODEL ** -0.5)
    wk = jax.random.normal(kk, (DMODEL, HEAD), dtype=jnp.float32) * (DMODEL ** -0.5)
    wv = jax.random.normal(kv, (DMODEL, HEAD), dtype=jnp.float32) * (DMODEL ** -0.5)

    # Parameter prep happens ONCE, off the hot path.
    w_qkv = jax.block_until_ready(prepare_qkv_weight(wq, wk, wv))

    attn = jax.jit(attention_forward)
    y = attn(x, w_qkv)
    jax.block_until_ready(y)

    y_ref = attention_reference(x, wq, wk, wv)
    assert y.shape == (B, L, HEAD)
    # All three matmuls use bf16 operands (f32 accumulation) -> loosened
    # tolerance relative to the all-f32 reference.
    assert jnp.allclose(y, y_ref, atol=5e-2, rtol=5e-2), "mismatch vs JAX reference"

    print("KERNEL_OK")
</pallas_src>

<mosaic_0001>
module attributes {stable_mosaic.version = 11 : i64} {
  func.func @_attention_kernel(%arg0: i32, %arg1: memref<34x128xf32, #tpu.memory_space<vmem>>, %arg2: memref<128x96xbf16, #tpu.memory_space<vmem>>, %arg3: memref<2x17x32xf32, #tpu.memory_space<vmem>>) attributes {dimension_semantics = [#tpu.dimension_semantics<arbitrary>], iteration_bounds = array<i64: 1>, scalar_prefetch = 0 : i64, scratch_operands = 0 : i64, tpu.core_type = #tpu.core_type<tc>, window_params = [{pipeline_mode = #tpu.pipeline_mode<synchronous>, transform_indices = @transform_0, window_bounds = array<i64: 34, 128>}, {pipeline_mode = #tpu.pipeline_mode<synchronous>, transform_indices = @transform_1, window_bounds = array<i64: 128, 96>}, {pipeline_mode = #tpu.pipeline_mode<synchronous>, transform_indices = @transform_2, window_bounds = array<i64: 2, 17, 32>}]} {
    %c0 = arith.constant 0 : index
    %c0_0 = arith.constant 0 : index
    %0 = vector.load %arg1[%c0, %c0_0] : memref<34x128xf32, #tpu.memory_space<vmem>>, vector<34x128xf32>
    %1 = arith.truncf %0 : vector<34x128xf32> to vector<34x128xbf16>
    %c0_1 = arith.constant 0 : index
    %c0_2 = arith.constant 0 : index
    %2 = vector.load %arg2[%c0_1, %c0_2] : memref<128x96xbf16, #tpu.memory_space<vmem>>, vector<128x96xbf16>
    %cst = arith.constant dense<0.000000e+00> : vector<34x96xf32>
    %3 = tpu.matmul %1, %2, %cst {dimension_numbers = #tpu.dot_dimension_numbers<[1], [0], [0], [1], [0, 0, 1, 1], [], []>} : vector<34x128xbf16>, vector<128x96xbf16>, vector<34x96xf32> -> vector<34x96xf32>
    %4 = tpu.iota {dimensions = array<i32: 0>} : vector<17x17xi32>
    %5 = tpu.iota {dimensions = array<i32: 1>} : vector<17x17xi32>
    %6 = arith.cmpi sge, %4, %5 : vector<17x17xi32>
    %7 = vector.extract_strided_slice %3 {offsets = [0, 0], sizes = [17, 96], strides = [1, 1]} : vector<34x96xf32> to vector<17x96xf32>
    %8 = vector.extract_strided_slice %7 {offsets = [0, 0], sizes = [17, 32], strides = [1, 1]} : vector<17x96xf32> to vector<17x32xf32>
    %9 = vector.extract_strided_slice %7 {offsets = [0, 32], sizes = [17, 32], strides = [1, 1]} : vector<17x96xf32> to vector<17x32xf32>
    %10 = vector.extract_strided_slice %7 {offsets = [0, 64], sizes = [17, 32], strides = [1, 1]} : vector<17x96xf32> to vector<17x32xf32>
    %11 = arith.truncf %8 : vector<17x32xf32> to vector<17x32xbf16>
    %12 = arith.truncf %9 : vector<17x32xf32> to vector<17x32xbf16>
    %cst_3 = arith.constant dense<0.000000e+00> : vector<17x17xf32>
    %13 = tpu.matmul %11, %12, %cst_3 {dimension_numbers = #tpu.dot_dimension_numbers<[1], [1], [0], [0], [0, 0, 1, 0], [], []>} : vector<17x32xbf16>, vector<17x32xbf16>, vector<17x17xf32> -> vector<17x17xf32>
    %cst_4 = arith.constant 0.176776692 : f32
    %14 = vector.broadcast %cst_4 : f32 to vector<17x17xf32>
    %15 = arith.mulf %13, %14 : vector<17x17xf32>
    %cst_5 = arith.constant -1.000000e+30 : f32
    %16 = vector.broadcast %cst_5 : f32 to vector<17x17xf32>
    %17 = arith.select %6, %15, %16 : vector<17x17xi1>, vector<17x17xf32>
    %cst_6 = arith.constant dense<0xFF800000> : vector<17xf32>
    %18 = vector.multi_reduction <maximumf>, %17, %cst_6 [1] : vector<17x17xf32> to vector<17xf32>
    %19 = vector.shape_cast %18 : vector<17xf32> to vector<17x1xf32>
    %20 = vector.broadcast %19 : vector<17x1xf32> to vector<17x17xf32>
    %21 = arith.subf %17, %20 : vector<17x17xf32>
    %22 = math.exp %21 : vector<17x17xf32>
    %cst_7 = arith.constant dense<0.000000e+00> : vector<17xf32>
    %23 = vector.multi_reduction <add>, %22, %cst_7 [1] : vector<17x17xf32> to vector<17xf32>
    %24 = vector.shape_cast %23 : vector<17xf32> to vector<17x1xf32>
    %25 = vector.broadcast %24 : vector<17x1xf32> to vector<17x17xf32>
    %26 = arith.divf %22, %25 : vector<17x17xf32>
    %27 = arith.truncf %26 : vector<17x17xf32> to vector<17x17xbf16>
    %28 = arith.truncf %10 : vector<17x32xf32> to vector<17x32xbf16>
    %cst_8 = arith.constant dense<0.000000e+00> : vector<17x32xf32>
    %29 = tpu.matmul %27, %28, %cst_8 {dimension_numbers = #tpu.dot_dimension_numbers<[1], [0], [0], [1], [0, 0, 1, 1], [], []>} : vector<17x17xbf16>, vector<17x32xbf16>, vector<17x32xf32> -> vector<17x32xf32>
    %c0_9 = arith.constant 0 : index
    %c0_10 = arith.constant 0 : index
    %c0_11 = arith.constant 0 : index
    %30 = vector.load %arg3[%c0_9, %c0_10, %c0_11] : memref<2x17x32xf32, #tpu.memory_space<vmem>>, vector<1x17x32xf32>
    %31 = vector.shape_cast %30 : vector<1x17x32xf32> to vector<17x32xf32>
    %32 = vector.shape_cast %29 : vector<17x32xf32> to vector<1x17x32xf32>
    tpu.vector_store %arg3[%c0_9, %c0_10, %c0_11], %32 {strides = array<i32>} : memref<2x17x32xf32, #tpu.memory_space<vmem>>, vector<1x17x32xf32>,
    %33 = vector.extract_strided_slice %3 {offsets = [17, 0], sizes = [17, 96], strides = [1, 1]} : vector<34x96xf32> to vector<17x96xf32>
    %34 = vector.extract_strided_slice %33 {offsets = [0, 0], sizes = [17, 32], strides = [1, 1]} : vector<17x96xf32> to vector<17x32xf32>
    %35 = vector.extract_strided_slice %33 {offsets = [0, 32], sizes = [17, 32], strides = [1, 1]} : vector<17x96xf32> to vector<17x32xf32>
    %36 = vector.extract_strided_slice %33 {offsets = [0, 64], sizes = [17, 32], strides = [1, 1]} : vector<17x96xf32> to vector<17x32xf32>
    %37 = arith.truncf %34 : vector<17x32xf32> to vector<17x32xbf16>
    %38 = arith.truncf %35 : vector<17x32xf32> to vector<17x32xbf16>
    %cst_12 = arith.constant dense<0.000000e+00> : vector<17x17xf32>
    %39 = tpu.matmul %37, %38, %cst_12 {dimension_numbers = #tpu.dot_dimension_numbers<[1], [1], [0], [0], [0, 0, 1, 0], [], []>} : vector<17x32xbf16>, vector<17x32xbf16>, vector<17x17xf32> -> vector<17x17xf32>
    %cst_13 = arith.constant 0.176776692 : f32
    %40 = vector.broadcast %cst_13 : f32 to vector<17x17xf32>
    %41 = arith.mulf %39, %40 : vector<17x17xf32>
    %cst_14 = arith.constant -1.000000e+30 : f32
    %42 = vector.broadcast %cst_14 : f32 to vector<17x17xf32>
    %43 = arith.select %6, %41, %42 : vector<17x17xi1>, vector<17x17xf32>
    %cst_15 = arith.constant dense<0xFF800000> : vector<17xf32>
    %44 = vector.multi_reduction <maximumf>, %43, %cst_15 [1] : vector<17x17xf32> to vector<17xf32>
    %45 = vector.shape_cast %44 : vector<17xf32> to vector<17x1xf32>
    %46 = vector.broadcast %45 : vector<17x1xf32> to vector<17x17xf32>
    %47 = arith.subf %43, %46 : vector<17x17xf32>
    %48 = math.exp %47 : vector<17x17xf32>
    %cst_16 = arith.constant dense<0.000000e+00> : vector<17xf32>
    %49 = vector.multi_reduction <add>, %48, %cst_16 [1] : vector<17x17xf32> to vector<17xf32>
    %50 = vector.shape_cast %49 : vector<17xf32> to vector<17x1xf32>
    %51 = vector.broadcast %50 : vector<17x1xf32> to vector<17x17xf32>
    %52 = arith.divf %48, %51 : vector<17x17xf32>
    %53 = arith.truncf %52 : vector<17x17xf32> to vector<17x17xbf16>
    %54 = arith.truncf %36 : vector<17x32xf32> to vector<17x32xbf16>
    %cst_17 = arith.constant dense<0.000000e+00> : vector<17x32xf32>
    %55 = tpu.matmul %53, %54, %cst_17 {dimension_numbers = #tpu.dot_dimension_numbers<[1], [0], [0], [1], [0, 0, 1, 1], [], []>} : vector<17x17xbf16>, vector<17x32xbf16>, vector<17x32xf32> -> vector<17x32xf32>
    %c1 = arith.constant 1 : index
    %c0_18 = arith.constant 0 : index
    %c0_19 = arith.constant 0 : index
    %56 = vector.load %arg3[%c1, %c0_18, %c0_19] : memref<2x17x32xf32, #tpu.memory_space<vmem>>, vector<1x17x32xf32>
    %57 = vector.shape_cast %56 : vector<1x17x32xf32> to vector<17x32xf32>
    %58 = vector.shape_cast %55 : vector<17x32xf32> to vector<1x17x32xf32>
    tpu.vector_store %arg3[%c1, %c0_18, %c0_19], %58 {strides = array<i32>} : memref<2x17x32xf32, #tpu.memory_space<vmem>>, vector<1x17x32xf32>,
    return
  }
  func.func @transform_0(%arg0: i32) -> (i32, i32) {
    %c0_i32 = arith.constant 0 : i32
    %c0_i32_0 = arith.constant 0 : i32
    %c0_i32_1 = arith.constant 0 : i32
    return %c0_i32, %c0_i32_0 : i32, i32
  }
  func.func @transform_1(%arg0: i32) -> (i32, i32) {
    %c0_i32 = arith.constant 0 : i32
    %c0_i32_0 = arith.constant 0 : i32
    %c0_i32_1 = arith.constant 0 : i32
    return %c0_i32, %c0_i32_0 : i32, i32
  }
  func.func @transform_2(%arg0: i32) -> (i32, i32, i32) {
    %c0_i32 = arith.constant 0 : i32
    %c0_i32_0 = arith.constant 0 : i32
    %c0_i32_1 = arith.constant 0 : i32
    %c0_i32_2 = arith.constant 0 : i32
    return %c0_i32, %c0_i32_0, %c0_i32_1 : i32, i32, i32
  }
}

</mosaic_0001>

<llo_original>
// kernel: attention_forward.1
$region0: #{attention_forward.1}
  #allocation0 [shape = 'u32[]', space=smem, size = 0x4, offset = 0x4, fixed_abs, tag = 'smem constant byte address 0x4 - core index']
  #allocation1 [shape = 'u32[72,128]{1,0:T(1,128)}', space=vmem, size = 0x9000, scoped, tag = 'internal scratch']
  %s0 = inlined_call_operand.vmem [shape: f32[34,128], index: 0, kind: input, shape index: {}]
  %s1 = inlined_call_operand.vmem [shape: bf16[128,96], index: 1, kind: input, shape index: {}]
  %s2 = inlined_call_operand.vmem [shape: f32[2,17,32], index: 2, kind: output, shape index: {}]
  %s3 = sld [smem:[#allocation0]]
  $region18: #{attention_forward.1} parent=0
    _
  %s5 = ssub.s32 1, %s3
  %s6 = scalar_select 0, %s5, %s3
  // Predicated region
  $region2: #{attention_forward.1} parent=0 // pred_check
    _
  $region3: #{attention_forward.1} parent=0 // pred_check_branch
    %8 = sbr.rel (0) target = $region5
  $region4: #{attention_forward.1} parent=0 // pred_region
    _
  $region5: #{attention_forward.1} parent=0 // pred_fallthru
    _
  // Predicated region
  $region6: #{attention_forward.1} parent=0 // pred_check
    _
  $region7: #{attention_forward.1} parent=0 // pred_check_branch
    %10 = sbr.rel (0) target = $region9
  $region8: #{attention_forward.1} parent=0 // pred_region
    _
  $region9: #{attention_forward.1} parent=0 // pred_fallthru
    _
  %v12 = vld [vmem:[%s0] sm:$0xff]
  %v13 = vld [vmem:[%s0 + $0x8] sm:$0xff]
  %v14 = vld [vmem:[%s0 + $0x10] sm:$0xff]
  %v15 = vld [vmem:[%s0 + $0x18] sm:$0xff]
  %v16 = vld [vmem:[%s0 + $0x20] sm:$0x3]
  %v17 = vpack.c.bf16 %v13, %v12
  %v18 = vpack.c.bf16 %v15, %v14
  %v19 = vpack.c.bf16 %v16, %v16
  %v20 = vld [vmem:[%s1] sm:$0xf]
  %v21 = vld [vmem:[%s1 + $0x4] sm:$0xf]
  %v22 = vld [vmem:[%s1 + $0x8] sm:$0xf]
  %v23 = vld [vmem:[%s1 + $0xc] sm:$0xf]
  %v24 = vld [vmem:[%s1 + $0x10] sm:$0xf]
  %v25 = vld [vmem:[%s1 + $0x14] sm:$0xf]
  %v26 = vld [vmem:[%s1 + $0x18] sm:$0xf]
  %v27 = vld [vmem:[%s1 + $0x1c] sm:$0xf]
  %v28 = vld [vmem:[%s1 + $0x20] sm:$0xf]
  %v29 = vld [vmem:[%s1 + $0x24] sm:$0xf]
  %v30 = vld [vmem:[%s1 + $0x28] sm:$0xf]
  %v31 = vld [vmem:[%s1 + $0x2c] sm:$0xf]
  %v32 = vld [vmem:[%s1 + $0x30] sm:$0xf]
  %v33 = vld [vmem:[%s1 + $0x34] sm:$0xf]
  %v34 = vld [vmem:[%s1 + $0x38] sm:$0xf]
  %v35 = vld [vmem:[%s1 + $0x3c] sm:$0xf]
  %v52 = vunpack.c.l.b16 %v20
  %v53 = vunpack.c.l.b16 %v21
  %v54 = vunpack.c.l.b16 %v22
  %v55 = vunpack.c.l.b16 %v23
  %v56 = vunpack.c.l.b16 %v24
  %v57 = vunpack.c.l.b16 %v25
  %v58 = vunpack.c.l.b16 %v26
  %v59 = vunpack.c.l.b16 %v27
  %v60 = vunpack.c.l.b16 %v28
  %v61 = vunpack.c.l.b16 %v29
  %v62 = vunpack.c.l.b16 %v30
  %v63 = vunpack.c.l.b16 %v31
  %v64 = vunpack.c.l.b16 %v32
  %v65 = vunpack.c.l.b16 %v33
  %v66 = vunpack.c.l.b16 %v34
  %v67 = vunpack.c.l.b16 %v35
  %v68 = vpack.c.b16 %v53, %v52
  %v69 = vpack.c.b16 %v55, %v54
  %v70 = vpack.c.b16 %v57, %v56
  %v71 = vpack.c.b16 %v59, %v58
  %v72 = vpack.c.b16 %v61, %v60
  %v73 = vpack.c.b16 %v63, %v62
  %v74 = vpack.c.b16 %v65, %v64
  %v75 = vpack.c.b16 %v67, %v66
  %84 = vmatpush.bf16.msra.mxu0 %v75
  %85 = vmatpush.bf16.msra.mxu0 %v74
  %86 = vmatpush.bf16.msra.mxu0 %v73
  %87 = vmatpush.bf16.msra.mxu0 %v72
  %88 = vmatpush.bf16.msra.mxu0 %v71
  %89 = vmatpush.bf16.msra.mxu0 %v70
  %90 = vmatpush.bf16.msra.mxu0 %v69
  %91 = vmatpush.bf16.msra.mxu0 %v68
  %92 = vmatmul.bf16.gmra.mxu0 %v17
  %v93 = vpop.f32.mrf.mxu0
  %v94 = vadd.f32 0.0, %v93
  %v95 = vpop.f32.mrf.mxu0
  %v96 = vadd.f32 0.0, %v95
  %97 = vmatmul.bf16.gmra.mxu0 %v18
  %v98 = vpop.f32.mrf.mxu0
  %v99 = vadd.f32 0.0, %v98
  %v100 = vpop.f32.mrf.mxu0
  %v101 = vadd.f32 0.0, %v100
  %102 = vmatmul.bf16.gmra.mxu0 %v19
  %v103 = vpop.f32.mrf.mxu0
  %v104 = vadd.f32 0.0, %v103
  %v105 = vpop.f32.mrf.mxu0
  %106 = vdwg.mxu0
  %v107 = vlaneseq
  %v108 = vshrl.u32 %v107, 7
  %v109 = vadd.s32 %v108, 8
  %v110 = vadd.s32 %v108, 16
  %v111 = vlaneseq
  %v112 = vand.u32 %v111, 127
  %vm113 = vcmp.ge.s32.totalorder %v108, %v112
  %vm114 = vcmp.ge.s32.totalorder %v109, %v112
  %vm115 = vcmp.ge.s32.totalorder %v110, %v112
  %v116 = vpack.c.bf16 %v96, %v94
  %v117 = vpack.c.bf16 %v99, %v99
  %120 = vrot.lane.b32.xlu0 %v116, 96
  %v121 = vpop.permute.xlu0 %120
  %122 = vrot.lane.b32.xlu0 %v117, 96
  %v123 = vpop.permute.xlu0 %122
  %vm124 = vcmask 261120
  %v126 = vsel %vm124, %v116, 0
  %v129 = vsel %vm124, %v117, 0
  %v132 = vsel %vm124, %v121, 0
  %v135 = vsel %vm124, %v123, 0
  %137 = vmatpush.bf16.xpose.msra.mxu0 0
  %138 = vmatpush.bf16.xpose.msra.mxu0 0
  %139 = vmatpush.bf16.xpose.msra.mxu0 0
  %140 = vmatpush.bf16.xpose.msra.mxu0 0
  %141 = vmatpush.bf16.xpose.msra.mxu0 0
  %142 = vmatpush.bf16.xpose.msra.mxu0 0
  %143 = vmatpush.bf16.xpose.msra.mxu0 %v135
  %144 = vmatpush.bf16.xpose.msra.mxu0 %v132
  %145 = vmatmul.bf16.gmra.mxu0 %v126
  %v146 = vpop.f32.mrf.mxu0
  %v147 = vadd.f32 0.0, %v146
  %v148 = vpop.f32.mrf.mxu0
  %v149 = vadd.f32 0.0, %v148
  %150 = vmatmul.bf16.gmra.mxu0 %v129
  %v151 = vpop.f32.mrf.mxu0
  %v152 = vadd.f32 0.0, %v151
  %v153 = vpop.f32.mrf.mxu0
  %154 = vdwg.mxu0
  %v155 = vmul.f32 %v147, 0.17677669
  %v156 = vmul.f32 %v149, 0.17677669
  %v157 = vmul.f32 %v152, 0.17677669
  %v158 = vsel %vm113, %v155, -1e+30
  %v159 = vsel %vm114, %v156, -1e+30
  %v160 = vsel %vm115, %v157, -1e+30
  %vm161 = vcmask 138240
  %v162 = vsel %vm161, %v158, -inf
  %163 = vmax.xlane.f32.xlu0 %v162
  %v164 = vpop.xlane.xlu0 %163
  %v165 = vsel %vm161, %v159, -inf
  %166 = vmax.xlane.f32.xlu0 %v165
  %v167 = vpop.xlane.xlu0 %166
  %vm168 = vcmask 131072
  %v169 = vsel %vm168, %v160, -inf
  %170 = vmax.xlane.f32.xlu0 %v169
  %v171 = vpop.xlane.xlu0 %170
  %v172 = vsub.f32 %v158, %v164
  %v173 = vsub.f32 %v159, %v167
  %v174 = vsub.f32 %v160, %v171
  %v175 = vmul.f32 %v172, 1.442695
  %v176 = vpow.pop %v175
  %v177 = vmul.f32 %v173, 1.442695
  %v178 = vpow.pop %v177
  %v179 = vmul.f32 %v174, 1.442695
  %v180 = vpow.pop %v179
  %v181 = vsel %vm161, %v176, 0.0
  %182 = vadd.xlane.f32.xlu0 %v181
  %v183 = vpop.xlane.xlu0 %182
  %v184 = vsel %vm161, %v178, 0.0
  %185 = vadd.xlane.f32.xlu0 %v184
  %v186 = vpop.xlane.xlu0 %185
  %v187 = vsel %vm168, %v180, 0.0
  %188 = vadd.xlane.f32.xlu0 %v187
  %v189 = vpop.xlane.xlu0 %188
  %v190 = vrcp.pop %v183
  %v191 = vmul.f32 %v183, %v190
  %v192 = vsub.f32 1.0, %v191
  %v193 = vmul.f32 %v190, %v192
  %v194 = vadd.f32 %v190, %v193
  %vm195 = vweird.f32 %v183
  %vm196 = vweird.f32 %v190
  %vm197 = vmor %vm195, %vm196
  %v198 = vsel %vm197, %v190, %v194
  %v199 = vand.u32 2147483647, %v183
  %vm200 = vcmp.eq.f32.partialorder %v199, 8.507059e+37
  %v201 = vand.u32 %v183, 2147483648
  %v202 = vor.u32 1.1754944e-38, %v201
  %v203 = vsel %vm200, %v202, %v198
  %v204 = vmul.f32 %v176, %v203
  %v205 = vrcp.pop %v186
  %v206 = vmul.f32 %v186, %v205
  %v207 = vsub.f32 1.0, %v206
  %v208 = vmul.f32 %v205, %v207
  %v209 = vadd.f32 %v205, %v208
  %vm210 = vweird.f32 %v186
  %vm211 = vweird.f32 %v205
  %vm212 = vmor %vm210, %vm211
  %v213 = vsel %vm212, %v205, %v209
  %v214 = vand.u32 2147483647, %v186
  %vm215 = vcmp.eq.f32.partialorder %v214, 8.507059e+37
  %v216 = vand.u32 %v186, 2147483648
  %v217 = vor.u32 1.1754944e-38, %v216
  %v218 = vsel %vm215, %v217, %v213
  %v219 = vmul.f32 %v178, %v218
  %v220 = vrcp.pop %v189
  %v221 = vmul.f32 %v189, %v220
  %v222 = vsub.f32 1.0, %v221
  %v223 = vmul.f32 %v220, %v222
  %v224 = vadd.f32 %v220, %v223
  %vm225 = vweird.f32 %v189
  %vm226 = vweird.f32 %v220
  %vm227 = vmor %vm225, %vm226
  %v228 = vsel %vm227, %v220, %v224
  %v229 = vand.u32 2147483647, %v189
  %vm230 = vcmp.eq.f32.partialorder %v229, 8.507059e+37
  %v231 = vand.u32 %v189, 2147483648
  %v232 = vor.u32 1.1754944e-38, %v231
  %v233 = vsel %vm230, %v232, %v228
  %v234 = vmul.f32 %v180, %v233
  %v235 = vpack.c.bf16 %v219, %v204
  %v236 = vpack.c.bf16 %v234, %v234
  %237 = vrot.lane.b32.xlu0 %v116, 64
  %v238 = vpop.permute.xlu0 %237
  %239 = vrot.lane.b32.xlu0 %v117, 64
  %v240 = vpop.permute.xlu0 %239
  %v243 = vsel %vm161, %v235, 0
  %v246 = vsel %vm161, %v236, 0
  %vm248 = vcmask 1040384
  %v249 = vsel 0, 4294967295, 65535
  %v250 = vsel %vm248, %v249, 0
  %v252 = vand.u32 %v240, %v250
  %254 = vmatpush.bf16.msra.mxu0 0
  %255 = vmatpush.bf16.msra.mxu0 0
  %256 = vmatpush.bf16.msra.mxu0 0
  %257 = vmatpush.bf16.msra.mxu0 0
  %258 = vmatpush.bf16.msra.mxu0 0
  %259 = vmatpush.bf16.msra.mxu0 0
  %260 = vmatpush.bf16.msra.mxu0 %v252
  %261 = vmatpush.bf16.msra.mxu0 %v238
  %262 = vmatmul.bf16.gmra.mxu0 %v243
  %v263 = vpop.f32.mrf.mxu0
  %v264 = vadd.f32 0.0, %v263
  %v265 = vpop.f32.mrf.mxu0
  %v266 = vadd.f32 0.0, %v265
  %267 = vmatmul.bf16.gmra.mxu0 %v246
  %v268 = vpop.f32.mrf.mxu0
  %v269 = vadd.f32 0.0, %v268
  %v270 = vpop.f32.mrf.mxu0
  %271 = vdwg.mxu0
  %272 = vst.msk [vmem:[%s2] sm:$0xff] %vm124, %v264
  %273 = vst.msk [vmem:[%s2 + $0x8] sm:$0xff] %vm124, %v266
  %vm274 = vcmask 253952
  %275 = vst.msk [vmem:[%s2 + $0x10] sm:$0x1] %vm274, %v269
  %v276 = vpack.c.bf16 %v101, %v99
  %v277 = vpack.c.bf16 %v104, %v104
  %vm278 = vsmask.f32 7424
  %v280 = vshrl.u32 %v276, 16
  %v282 = vshll.u32 %v276, 16
  %v284 = vrot.slane %v282, 1
  %v285 = vor.u32 %v280, %v284
  %v287 = vshll.u32 %v277, 16
  %v289 = vrot.slane %v287, 1
  %v290 = vsel %vm278, %v285, %v289
  %v291 = vshrl.u32 %v277, 16
  %293 = vrot.lane.b32.xlu0 %v290, 96
  %v294 = vpop.permute.xlu0 %293
  %295 = vrot.lane.b32.xlu0 %v291, 96
  %v296 = vpop.permute.xlu0 %295
  %v298 = vsel %vm124, %v290, 0
  %v301 = vsel %vm124, %v291, 0
  %v304 = vsel %vm124, %v294, 0
  %v307 = vsel %vm124, %v296, 0
  %309 = vmatpush.bf16.xpose.msra.mxu0 0
  %310 = vmatpush.bf16.xpose.msra.mxu0 0
  %311 = vmatpush.bf16.xpose.msra.mxu0 0
  %312 = vmatpush.bf16.xpose.msra.mxu0 0
  %313 = vmatpush.bf16.xpose.msra.mxu0 0
  %314 = vmatpush.bf16.xpose.msra.mxu0 0
  %315 = vmatpush.bf16.xpose.msra.mxu0 %v307
  %316 = vmatpush.bf16.xpose.msra.mxu0 %v304
  %317 = vmatmul.bf16.gmra.mxu0 %v298
  %v318 = vpop.f32.mrf.mxu0
  %v319 = vadd.f32 0.0, %v318
  %v320 = vpop.f32.mrf.mxu0
  %v321 = vadd.f32 0.0, %v320
  %322 = vmatmul.bf16.gmra.mxu0 %v301
  %v323 = vpop.f32.mrf.mxu0
  %v324 = vadd.f32 0.0, %v323
  %v325 = vpop.f32.mrf.mxu0
  %326 = vdwg.mxu0
  %v327 = vmul.f32 %v319, 0.17677669
  %v328 = vmul.f32 %v321, 0.17677669
  %v329 = vmul.f32 %v324, 0.17677669
  %v330 = vsel %vm113, %v327, -1e+30
  %v331 = vsel %vm114, %v328, -1e+30
  %v332 = vsel %vm115, %v329, -1e+30
  %v333 = vsel %vm161, %v330, -inf
  %334 = vmax.xlane.f32.xlu0 %v333
  %v335 = vpop.xlane.xlu0 %334
  %v336 = vsel %vm161, %v331, -inf
  %337 = vmax.xlane.f32.xlu0 %v336
  %v338 = vpop.xlane.xlu0 %337
  %v339 = vsel %vm168, %v332, -inf
  %340 = vmax.xlane.f32.xlu0 %v339
  %v341 = vpop.xlane.xlu0 %340
  %v342 = vsub.f32 %v330, %v335
  %v343 = vsub.f32 %v331, %v338
  %v344 = vsub.f32 %v332, %v341
  %v345 = vmul.f32 %v342, 1.442695
  %v346 = vpow.pop %v345
  %v347 = vmul.f32 %v343, 1.442695
  %v348 = vpow.pop %v347
  %v349 = vmul.f32 %v344, 1.442695
  %v350 = vpow.pop %v349
  %v351 = vsel %vm161, %v346, 0.0
  %352 = vadd.xlane.f32.xlu0 %v351
  %v353 = vpop.xlane.xlu0 %352
  %v354 = vsel %vm161, %v348, 0.0
  %355 = vadd.xlane.f32.xlu0 %v354
  %v356 = vpop.xlane.xlu0 %355
  %v357 = vsel %vm168, %v350, 0.0
  %358 = vadd.xlane.f32.xlu0 %v357
  %v359 = vpop.xlane.xlu0 %358
  %v360 = vrcp.pop %v353
  %v361 = vmul.f32 %v353, %v360
  %v362 = vsub.f32 1.0, %v361
  %v363 = vmul.f32 %v360, %v362
  %v364 = vadd.f32 %v360, %v363
  %vm365 = vweird.f32 %v353
  %vm366 = vweird.f32 %v360
  %vm367 = vmor %vm365, %vm366
  %v368 = vsel %vm367, %v360, %v364
  %v369 = vand.u32 2147483647, %v353
  %vm370 = vcmp.eq.f32.partialorder %v369, 8.507059e+37
  %v371 = vand.u32 %v353, 2147483648
  %v372 = vor.u32 1.1754944e-38, %v371
  %v373 = vsel %vm370, %v372, %v368
  %v374 = vmul.f32 %v346, %v373
  %v375 = vrcp.pop %v356
  %v376 = vmul.f32 %v356, %v375
  %v377 = vsub.f32 1.0, %v376
  %v378 = vmul.f32 %v375, %v377
  %v379 = vadd.f32 %v375, %v378
  %vm380 = vweird.f32 %v356
  %vm381 = vweird.f32 %v375
  %vm382 = vmor %vm380, %vm381
  %v383 = vsel %vm382, %v375, %v379
  %v384 = vand.u32 2147483647, %v356
  %vm385 = vcmp.eq.f32.partialorder %v384, 8.507059e+37
  %v386 = vand.u32 %v356, 2147483648
  %v387 = vor.u32 1.1754944e-38, %v386
  %v388 = vsel %vm385, %v387, %v383
  %v389 = vmul.f32 %v348, %v388
  %v390 = vrcp.pop %v359
  %v391 = vmul.f32 %v359, %v390
  %v392 = vsub.f32 1.0, %v391
  %v393 = vmul.f32 %v390, %v392
  %v394 = vadd.f32 %v390, %v393
  %vm395 = vweird.f32 %v359
  %vm396 = vweird.f32 %v390
  %vm397 = vmor %vm395, %vm396
  %v398 = vsel %vm397, %v390, %v394
  %v399 = vand.u32 2147483647, %v359
  %vm400 = vcmp.eq.f32.partialorder %v399, 8.507059e+37
  %v401 = vand.u32 %v359, 2147483648
  %v402 = vor.u32 1.1754944e-38, %v401
  %v403 = vsel %vm400, %v402, %v398
  %v404 = vmul.f32 %v350, %v403
  %v405 = vpack.c.bf16 %v389, %v374
  %v406 = vpack.c.bf16 %v404, %v404
  %407 = vrot.lane.b32.xlu0 %v290, 64
  %v408 = vpop.permute.xlu0 %407
  %409 = vrot.lane.b32.xlu0 %v291, 64
  %v410 = vpop.permute.xlu0 %409
  %v413 = vsel %vm161, %v405, 0
  %v416 = vsel %vm161, %v406, 0
  %v419 = vand.u32 %v410, %v250
  %421 = vmatpush.bf16.msra.mxu0 0
  %422 = vmatpush.bf16.msra.mxu0 0
  %423 = vmatpush.bf16.msra.mxu0 0
  %424 = vmatpush.bf16.msra.mxu0 0
  %425 = vmatpush.bf16.msra.mxu0 0
  %426 = vmatpush.bf16.msra.mxu0 0
  %427 = vmatpush.bf16.msra.mxu0 %v419
  %428 = vmatpush.bf16.msra.mxu0 %v408
  %429 = vmatmul.bf16.gmra.mxu0 %v413
  %v430 = vpop.f32.mrf.mxu0
  %v431 = vadd.f32 0.0, %v430
  %v432 = vpop.f32.mrf.mxu0
  %v433 = vadd.f32 0.0, %v432
  %434 = vmatmul.bf16.gmra.mxu0 %v416
  %v435 = vpop.f32.mrf.mxu0
  %v436 = vadd.f32 0.0, %v435
  %v437 = vpop.f32.mrf.mxu0
  %438 = vdwg.mxu0
  %s439 = scalar_lea.vmem %s2, 24
  %440 = vst.msk [vmem:[%s439] sm:$0xff] %vm124, %v431
  %441 = vst.msk [vmem:[%s439 + $0x8] sm:$0xff] %vm124, %v433
  %442 = vst.msk [vmem:[%s439 + $0x10] sm:$0x1] %vm274, %v436
  // Predicated region
  $region10: #{attention_forward.1} parent=0 // pred_check
    _
  $region11: #{attention_forward.1} parent=0 // pred_check_branch
    %444 = sbr.rel (0) target = $region13
  $region12: #{attention_forward.1} parent=0 // pred_region
    _
  $region13: #{attention_forward.1} parent=0 // pred_fallthru
    _
  // Predicated region
  $region14: #{attention_forward.1} parent=0 // pred_check
    _
  $region15: #{attention_forward.1} parent=0 // pred_check_branch
    %446 = sbr.rel (0) target = $region17
  $region16: #{attention_forward.1} parent=0 // pred_region
    _
  $region17: #{attention_forward.1} parent=0 // pred_fallthru
    _

</llo_original>
